<compile_context>
chip_gen: v7x
topology: tpu7x:2x2x1
jax: 0.10.0
libtpu: 0.0.40
codegen_flags: <defaults>
</compile_context>

<pallas_src>
import functools

import jax
import jax.numpy as jnp
from jax import lax
from jax.experimental import pallas as pl
from jax.experimental.pallas import tpu as pltpu

LANE = 128                 # lane width (last dim)
SUBBLOCK = 8 * LANE        # one (8,128) f32 tile = 1024 elements


def _device_kind():
    try:
        return jax.devices()[0].device_kind.lower()
    except Exception:
        return ""


def _num_requested_cores():
    # Only v7x has 2 TensorCores per chip; on 1-TC chips (v5e/v6e) the 2-way
    # split is a serial loop with extra masking/epilogue -> pure overhead.
    return 2 if "v7" in _device_kind() else 1


def _max_block_rows():
    kind = _device_kind()
    if "v5" in kind:
        # 2 inputs x 2 pipeline buffers x 2 MiB = 8 MiB < 16 MiB scoped default.
        return 4096
    # v6e / v7x: 2 x 2 x 4 MiB = 16 MiB < 32 MiB scoped default.
    return 8192


def _dice_sums_kernel(x_ref, y_ref, inter_ref, sum_ref, inter_acc, sum_acc,
                      *, rows_total, block_rows, blocks_per_core, num_blocks,
                      needs_mask):
    c = pl.program_id(0)
    i = pl.program_id(1)

    # Zero the vreg-sized accumulators at the start of each core's row range.
    @pl.when(i == 0)
    def _():
        inter_acc[...] = jnp.zeros_like(inter_acc)
        sum_acc[...] = jnp.zeros_like(sum_acc)

    x = x_ref[...].astype(jnp.float32)
    y = y_ref[...].astype(jnp.float32)

    def fold(v):
        # (block_rows, 128) -> (8, 128): per-vreg VALU adds over the leading
        # axis (no cross-lane / XLU work until the final epilogue).
        return jnp.sum(v.reshape(-1, 8, LANE), axis=0)

    global_block = c * blocks_per_core + i

    if needs_mask:
        # Fast unmasked path for all full, in-range blocks.
        @pl.when(global_block < num_blocks - 1)
        def _():
            inter_acc[...] += fold(x * y)
            sum_acc[...] += fold(x + y)

        # Masked path only for the ragged last block and any clamped overflow
        # block from the 2-core split (valid_rows <= 0 -> contributes zero).
        @pl.when(global_block >= num_blocks - 1)
        def _():
            valid_rows = rows_total - global_block * block_rows
            row_ids = lax.broadcasted_iota(jnp.int32, x.shape, 0)
            m = row_ids < valid_rows
            xm = jnp.where(m, x, 0.0)
            ym = jnp.where(m, y, 0.0)
            inter_acc[...] += fold(xm * ym)
            sum_acc[...] += fold(xm + ym)
    else:
        inter_acc[...] += fold(x * y)
        sum_acc[...] += fold(x + y)

    # Single cross-lane reduction + scalar SMEM write per core range.
    @pl.when(i == pl.num_programs(1) - 1)
    def _():
        inter_ref[0, 0] = jnp.sum(inter_acc[...])
        sum_ref[0, 0] = jnp.sum(sum_acc[...])


def dice_loss(inputs, targets, smooth=1.0):
    """Exact semantics of DiceLoss.forward: 1 - (2*I + s)/(Sx + Sy + s)."""
    x = inputs.reshape(-1)
    y = targets.reshape(-1)
    n = x.shape[0]

    # Kernel streams the 1024-aligned prefix; the (<1024) tail is folded in
    # the wrapper (no jnp.pad HBM copy of the whole array).
    n_main = (n // SUBBLOCK) * SUBBLOCK

    intersection = jnp.float32(0.0)
    sum_xy = jnp.float32(0.0)

    if n_main > 0:
        rows = n_main // LANE                  # multiple of 8
        x2 = x[:n_main].reshape(rows, LANE)    # lane-dense, layout-preserving
        y2 = y[:n_main].reshape(rows, LANE)

        block_rows = min(_max_block_rows(), rows)   # multiple of 8 (16/32 too)
        num_blocks = pl.cdiv(rows, block_rows)
        num_cores = min(_num_requested_cores(), num_blocks)
        blocks_per_core = pl.cdiv(num_blocks, num_cores)
        needs_mask = (num_blocks * block_rows != rows) or (
            num_cores * blocks_per_core != num_blocks)

        def in_map(c, i):
            blk = c * blocks_per_core + i
            # Clamp overflow blocks; repeated block index -> pipeliner skips
            # the re-DMA, and the masked path zeroes their contribution.
            return (jnp.minimum(blk, num_blocks - 1), 0)

        kernel = functools.partial(
            _dice_sums_kernel,
            rows_total=rows,
            block_rows=block_rows,
            blocks_per_core=blocks_per_core,
            num_blocks=num_blocks,
            needs_mask=needs_mask,
        )

        part_shape = jax.ShapeDtypeStruct((num_cores, 1), jnp.float32)
        smem_spec = pl.BlockSpec((1, 1), lambda c, i: (c, 0),
                                 memory_space=pltpu.SMEM)

        bytes_accessed = n_main * (x2.dtype.itemsize + y2.dtype.itemsize) + 8 * num_cores
        cost = pl.CostEstimate(flops=3 * n_main, transcendentals=0,
                               bytes_accessed=bytes_accessed)

        inter_p, sum_p = pl.pallas_call(
            kernel,
            out_shape=(part_shape, part_shape),
            grid=(num_cores, blocks_per_core),
            in_specs=[
                pl.BlockSpec((block_rows, LANE), in_map),
                pl.BlockSpec((block_rows, LANE), in_map),
            ],
            out_specs=(smem_spec, smem_spec),
            scratch_shapes=[
                pltpu.VMEM((8, LANE), jnp.float32),
                pltpu.VMEM((8, LANE), jnp.float32),
            ],
            compiler_params=pltpu.CompilerParams(
                dimension_semantics=("parallel", "arbitrary")),
            cost_estimate=cost,
        )(x2, y2)

        intersection = jnp.sum(inter_p)
        sum_xy = jnp.sum(sum_p)

    if n_main != n:
        tx = x[n_main:].astype(jnp.float32)
        ty = y[n_main:].astype(jnp.float32)
        intersection = intersection + jnp.sum(tx * ty)
        sum_xy = sum_xy + jnp.sum(tx) + jnp.sum(ty)

    dice = (2.0 * intersection + smooth) / (sum_xy + smooth)
    return 1.0 - dice


def dice_loss_ref(inputs, targets, smooth=1.0):
    x = inputs.reshape(-1).astype(jnp.float32)
    y = targets.reshape(-1).astype(jnp.float32)
    inter = jnp.sum(x * y)
    return 1.0 - (2.0 * inter + smooth) / (jnp.sum(x) + jnp.sum(y) + smooth)


if __name__ == "__main__":
    key = jax.random.PRNGKey(0)
    k1, k2 = jax.random.split(key)
    # NCHW-shaped tensors like the PyTorch module would receive
    inputs = jax.random.uniform(k1, (2, 4, 16, 16), dtype=jnp.float32)
    targets = (jax.random.uniform(k2, (2, 4, 16, 16)) > 0.5).astype(jnp.float32)

    out = dice_loss(inputs, targets, smooth=1.0)
    out = jax.block_until_ready(out)

    ref = dice_loss_ref(inputs, targets, smooth=1.0)
    assert jnp.allclose(out, ref, atol=1e-5, rtol=1e-5), (out, ref)
    print("KERNEL_OK")
</pallas_src>

<mosaic_0001>
module attributes {stable_mosaic.version = 11 : i64} {
  func.func @_dice_sums_kernel(%arg0: i32, %arg1: i32, %arg2: memref<16x128xf32, #tpu.memory_space<vmem>>, %arg3: memref<16x128xf32, #tpu.memory_space<vmem>>, %arg4: memref<1x1xf32, #tpu.memory_space<smem>>, %arg5: memref<1x1xf32, #tpu.memory_space<smem>>, %arg6: memref<8x128xf32, #tpu.memory_space<vmem>>, %arg7: memref<8x128xf32, #tpu.memory_space<vmem>>) attributes {dimension_semantics = [#tpu.dimension_semantics<parallel>, #tpu.dimension_semantics<arbitrary>], iteration_bounds = array<i64: 1, 1>, scalar_prefetch = 0 : i64, scratch_operands = 2 : i64, tpu.core_type = #tpu.core_type<tc>, window_params = [{transform_indices = @transform_0, window_bounds = array<i64: 16, 128>}, {transform_indices = @transform_1, window_bounds = array<i64: 16, 128>}, {transform_indices = @transform_2, window_bounds = array<i64: 1, 1>}, {transform_indices = @transform_3, window_bounds = array<i64: 1, 1>}]} {
    %c0_i32 = arith.constant 0 : i32
    %0 = arith.cmpi eq, %arg1, %c0_i32 : i32
    %1 = arith.extui %0 : i1 to i32
    %c0_i32_0 = arith.constant 0 : i32
    %2 = arith.cmpi ne, %1, %c0_i32_0 : i32
    scf.if %2 {
      %cst_15 = arith.constant 0.000000e+00 : f32
      %20 = vector.broadcast %cst_15 : f32 to vector<8x128xf32>
      %c0_16 = arith.constant 0 : index
      %c0_17 = arith.constant 0 : index
      %21 = vector.load %arg6[%c0_16, %c0_17] : memref<8x128xf32, #tpu.memory_space<vmem>>, vector<8x128xf32>
      tpu.vector_store %arg6[%c0_16, %c0_17], %20 {strides = array<i32>} : memref<8x128xf32, #tpu.memory_space<vmem>>, vector<8x128xf32>,
      %cst_18 = arith.constant 0.000000e+00 : f32
      %22 = vector.broadcast %cst_18 : f32 to vector<8x128xf32>
      %c0_19 = arith.constant 0 : index
      %c0_20 = arith.constant 0 : index
      %23 = vector.load %arg7[%c0_19, %c0_20] : memref<8x128xf32, #tpu.memory_space<vmem>>, vector<8x128xf32>
      tpu.vector_store %arg7[%c0_19, %c0_20], %22 {strides = array<i32>} : memref<8x128xf32, #tpu.memory_space<vmem>>, vector<8x128xf32>,
    } else {
    }
    %c0 = arith.constant 0 : index
    %c0_1 = arith.constant 0 : index
    %3 = vector.load %arg2[%c0, %c0_1] : memref<16x128xf32, #tpu.memory_space<vmem>>, vector<16x128xf32>
    %c0_2 = arith.constant 0 : index
    %c0_3 = arith.constant 0 : index
    %4 = vector.load %arg3[%c0_2, %c0_3] : memref<16x128xf32, #tpu.memory_space<vmem>>, vector<16x128xf32>
    %c0_4 = arith.constant 0 : index
    %c0_5 = arith.constant 0 : index
    %5 = vector.load %arg6[%c0_4, %c0_5] : memref<8x128xf32, #tpu.memory_space<vmem>>, vector<8x128xf32>
    %6 = arith.mulf %3, %4 : vector<16x128xf32>
    %7 = vector.shape_cast %6 : vector<16x128xf32> to vector<2x8x128xf32>
    %cst = arith.constant dense<0.000000e+00> : vector<8x128xf32>
    %8 = vector.multi_reduction <add>, %7, %cst [0] : vector<2x8x128xf32> to vector<8x128xf32>
    %9 = arith.addf %5, %8 : vector<8x128xf32>
    %c0_6 = arith.constant 0 : index
    %c0_7 = arith.constant 0 : index
    %10 = vector.load %arg6[%c0_6, %c0_7] : memref<8x128xf32, #tpu.memory_space<vmem>>, vector<8x128xf32>
    tpu.vector_store %arg6[%c0_6, %c0_7], %9 {strides = array<i32>} : memref<8x128xf32, #tpu.memory_space<vmem>>, vector<8x128xf32>,
    %c0_8 = arith.constant 0 : index
    %c0_9 = arith.constant 0 : index
    %11 = vector.load %arg7[%c0_8, %c0_9] : memref<8x128xf32, #tpu.memory_space<vmem>>, vector<8x128xf32>
    %12 = arith.addf %3, %4 : vector<16x128xf32>
    %13 = vector.shape_cast %12 : vector<16x128xf32> to vector<2x8x128xf32>
    %cst_10 = arith.constant dense<0.000000e+00> : vector<8x128xf32>
    %14 = vector.multi_reduction <add>, %13, %cst_10 [0] : vector<2x8x128xf32> to vector<8x128xf32>
    %15 = arith.addf %11, %14 : vector<8x128xf32>
    %c0_11 = arith.constant 0 : index
    %c0_12 = arith.constant 0 : index
    %16 = vector.load %arg7[%c0_11, %c0_12] : memref<8x128xf32, #tpu.memory_space<vmem>>, vector<8x128xf32>
    tpu.vector_store %arg7[%c0_11, %c0_12], %15 {strides = array<i32>} : memref<8x128xf32, #tpu.memory_space<vmem>>, vector<8x128xf32>,
    %c0_i32_13 = arith.constant 0 : i32
    %17 = arith.cmpi eq, %arg1, %c0_i32_13 : i32
    %18 = arith.extui %17 : i1 to i32
    %c0_i32_14 = arith.constant 0 : i32
    %19 = arith.cmpi ne, %18, %c0_i32_14 : i32
    scf.if %19 {
      %c0_15 = arith.constant 0 : index
      %c0_16 = arith.constant 0 : index
      %20 = vector.load %arg6[%c0_15, %c0_16] : memref<8x128xf32, #tpu.memory_space<vmem>>, vector<8x128xf32>
      %21 = vector.shape_cast %20 : vector<8x128xf32> to vector<1x8x128xf32>
      %cst_17 = arith.constant dense<0.000000e+00> : vector<1xf32>
      %22 = vector.multi_reduction <add>, %21, %cst_17 [1, 2] : vector<1x8x128xf32> to vector<1xf32>
      %23 = vector.shape_cast %22 : vector<1xf32> to vector<1x1x1xf32>
      %24 = vector.extract %23[0, 0, 0] : f32 from vector<1x1x1xf32>
      %c0_18 = arith.constant 0 : index
      %c0_19 = arith.constant 0 : index
      %25 = memref.load %arg4[%c0_18, %c0_19] : memref<1x1xf32, #tpu.memory_space<smem>>
      memref.store %24, %arg4[%c0_18, %c0_19] : memref<1x1xf32, #tpu.memory_space<smem>>
      %c0_20 = arith.constant 0 : index
      %c0_21 = arith.constant 0 : index
      %26 = vector.load %arg7[%c0_20, %c0_21] : memref<8x128xf32, #tpu.memory_space<vmem>>, vector<8x128xf32>
      %27 = vector.shape_cast %26 : vector<8x128xf32> to vector<1x8x128xf32>
      %cst_22 = arith.constant dense<0.000000e+00> : vector<1xf32>
      %28 = vector.multi_reduction <add>, %27, %cst_22 [1, 2] : vector<1x8x128xf32> to vector<1xf32>
      %29 = vector.shape_cast %28 : vector<1xf32> to vector<1x1x1xf32>
      %30 = vector.extract %29[0, 0, 0] : f32 from vector<1x1x1xf32>
      %c0_23 = arith.constant 0 : index
      %c0_24 = arith.constant 0 : index
      %31 = memref.load %arg5[%c0_23, %c0_24] : memref<1x1xf32, #tpu.memory_space<smem>>
      memref.store %30, %arg5[%c0_23, %c0_24] : memref<1x1xf32, #tpu.memory_space<smem>>
    } else {
    }
    return
  }
  func.func @transform_0(%arg0: i32, %arg1: i32) -> (i32, i32) {
    %c1_i32 = arith.constant 1 : i32
    %0 = arith.muli %arg0, %c1_i32 : i32
    %1 = arith.addi %0, %arg1 : i32
    %c0_i32 = arith.constant 0 : i32
    %2 = arith.minsi %1, %c0_i32 : i32
    %c0_i32_0 = arith.constant 0 : i32
    %c0_i32_1 = arith.constant 0 : i32
    return %2, %c0_i32_0 : i32, i32
  }
  func.func @transform_1(%arg0: i32, %arg1: i32) -> (i32, i32) {
    %c1_i32 = arith.constant 1 : i32
    %0 = arith.muli %arg0, %c1_i32 : i32
    %1 = arith.addi %0, %arg1 : i32
    %c0_i32 = arith.constant 0 : i32
    %2 = arith.minsi %1, %c0_i32 : i32
    %c0_i32_0 = arith.constant 0 : i32
    %c0_i32_1 = arith.constant 0 : i32
    return %2, %c0_i32_0 : i32, i32
  }
  func.func @transform_2(%arg0: i32, %arg1: i32) -> (i32, i32) {
    %c0_i32 = arith.constant 0 : i32
    %c0_i32_0 = arith.constant 0 : i32
    return %arg0, %c0_i32 : i32, i32
  }
  func.func @transform_3(%arg0: i32, %arg1: i32) -> (i32, i32) {
    %c0_i32 = arith.constant 0 : i32
    %c0_i32_0 = arith.constant 0 : i32
    return %arg0, %c0_i32 : i32, i32
  }
}

</mosaic_0001>

<llo_original>
// kernel: tpu_custom_call.1
$region0: #{tpu_custom_call.1}
  #allocation0 [shape = 'u32[]', space=smem, size = 0x4, offset = 0x4, fixed_abs, tag = 'smem constant byte address 0x4 - core index']
  #allocation1 [shape = 'u32[144,128]{1,0:T(1,128)}', space=vmem, size = 0x12000, scoped, tag = 'internal scratch']
  #allocation2 [shape = 'f32[8,128]{1,0:T(8,128)}', space=vmem, size = 0x1000, scoped, tag = 'scratch operand']
  #allocation3 [shape = 'f32[8,128]{1,0:T(8,128)}', space=vmem, size = 0x1000, scoped, tag = 'scratch operand']
  %s0 = inlined_call_operand.hbm [shape: f32[16,128], index: 0, kind: input, shape index: {}]
  %s1 = inlined_call_operand.hbm [shape: f32[16,128], index: 1, kind: input, shape index: {}]
  %s2 = inlined_call_operand.hbm [shape: f32[1,1], index: 2, kind: output, shape index: {0}]
  %s3 = inlined_call_operand.hbm [shape: f32[1,1], index: 3, kind: output, shape index: {1}]
  %4 = xla_tuple %s2, %s3
  %s5 = sld [smem:[#allocation0]]
  $region42: #{tpu_custom_call.1} parent=0
    _
  %s7 = ssub.s32 1, %s5
  %s8 = scalar_select 0, %s7, %s5
  $region1: #{tpu_custom_call.1} parent=0
    #allocation4 [shape = 'u8[8192]{0}', space=vmem, size = 0x2000, scoped, tag = 'input window, operand 0, single buffered']
    #allocation5 [shape = 's32[1]{0}', space=sflag, size = 0x4, scoped, tag = 'scoped memory for tpu_custom_call.1']
    #allocation6 [shape = 's32[1]{0}', space=sflag, size = 0x4, scoped, tag = 'scoped memory for tpu_custom_call.1']
    #allocation7 [shape = 'u8[8192]{0}', space=vmem, size = 0x2000, scoped, tag = 'input window, operand 1, single buffered']
    #allocation8 [shape = 's32[1]{0}', space=sflag, size = 0x4, scoped, tag = 'scoped memory for tpu_custom_call.1']
    #allocation9 [shape = 'u8[512]{0}', space=smem, size = 0x200, scoped, tag = 'output window, operand 0, single buffered']
    #allocation10 [shape = 'u8[512]{0}', space=smem, size = 0x200, scoped, tag = 'output window, operand 1, single buffered']
    #allocation11 [shape = 's32[1]{0}', space=sflag, size = 0x4, scoped, tag = 'scoped memory for tpu_custom_call.1']
    %9 = vsyncpa [#allocation5], 0
    %10 = vsyncpa [#allocation8], 0
    %11 = vsyncpa [#allocation6], 0
    %12 = vsyncpa [#allocation11], 0
    // Predicated region
    $region2: #{tpu_custom_call.1} parent=1 // pred_check
      _
    $region3: #{tpu_custom_call.1} parent=1 // pred_check_branch
      %14 = sbr.rel (0) target = $region5
    $region4: #{tpu_custom_call.1} parent=1 // pred_region
      %s15 = sadd.s32 0, 0
      %p16 = scmp.lt.s32.totalorder %s15, 0
      %s17 = scalar_select %p16, %s15, 0
      %s18 = smul.u32 2, %s17
      %s20 = ssub.s32 256, 256
      %21 = vsyncadd [#allocation5], %s20
      %s22 = smul.addr %s18, 128
      %s23 = scalar_lea.hbm %s0, %s22
      %s24 = sshll.u32 [#allocation4], 4
      %s25 = int_to_ptr.vmem [resolvable:$true] %s24
      %30 = dma.hbm_to_vmem [thread:$0]  %s23, 256, %s25, [#allocation5], 128, 128, 8
    $region5: #{tpu_custom_call.1} parent=1 // pred_fallthru
      _
    // Predicated region
    $region6: #{tpu_custom_call.1} parent=1 // pred_check
      _
    $region7: #{tpu_custom_call.1} parent=1 // pred_check_branch
      %32 = sbr.rel (0) target = $region9
    $region8: #{tpu_custom_call.1} parent=1 // pred_region
      %s33 = sadd.s32 0, 0
      %p34 = scmp.lt.s32.totalorder %s33, 0
      %s35 = scalar_select %p34, %s33, 0
      %s36 = smul.u32 2, %s35
      %s38 = ssub.s32 256, 256
      %39 = vsyncadd [#allocation8], %s38
      %s40 = smul.addr %s36, 128
      %s41 = scalar_lea.hbm %s1, %s40
      %s42 = sshll.u32 [#allocation7], 4
      %s43 = int_to_ptr.vmem [resolvable:$true] %s42
      %48 = dma.hbm_to_vmem [thread:$0]  %s41, 256, %s43, [#allocation8], 128, 128, 8
    $region9: #{tpu_custom_call.1} parent=1 // pred_fallthru
      _
    // Predicated region
    $region10: #{tpu_custom_call.1} parent=1 // pred_check
      _
    $region11: #{tpu_custom_call.1} parent=1 // pred_check_branch
      %50 = sbr.rel (0) target = $region13
    $region12: #{tpu_custom_call.1} parent=1 // pred_region
      %51 = dma.done [#allocation5], 256
    $region13: #{tpu_custom_call.1} parent=1 // pred_fallthru
      _
    // Predicated region
    $region14: #{tpu_custom_call.1} parent=1 // pred_check
      _
    $region15: #{tpu_custom_call.1} parent=1 // pred_check_branch
      %53 = sbr.rel (0) target = $region17
    $region16: #{tpu_custom_call.1} parent=1 // pred_region
      %54 = dma.done [#allocation8], 256
    $region17: #{tpu_custom_call.1} parent=1 // pred_fallthru
      _
    %s55 = sadd.s32 0, 0
    %p56 = scmp.lt.s32.totalorder %s55, 0
    %s57 = scalar_select %p56, %s55, 0
    %s58 = smul.u32 2, %s57
    %s59 = sadd.s32 0, 0
    %p60 = scmp.lt.s32.totalorder %s59, 0
    %s61 = scalar_select %p60, %s59, 0
    %s62 = smul.u32 2, %s61
    %p63 = scmp.eq.s32.totalorder 0, 0
    // Predicated region
    $region18: #{tpu_custom_call.1} parent=1 // pred_check
      %p64 = pneg %p63
    $region19: #{tpu_custom_call.1} parent=1 // pred_check_branch
      %66 = sbr.rel (%p64) target = $region21
    $region20: #{tpu_custom_call.1} parent=1 // pred_region
      %67 = vst [vmem:[#allocation2] sm:$0xff] 0.0
      %68 = vst [vmem:[#allocation3] sm:$0xff] 0.0
    $region21: #{tpu_custom_call.1} parent=1 // pred_fallthru
      _
    %v69 = vld [vmem:[#allocation4] sm:$0xff]
    %v70 = vld [vmem:[#allocation4 + $0x8] sm:$0xff]
    %v71 = vld [vmem:[#allocation7] sm:$0xff]
    %v72 = vld [vmem:[#allocation7 + $0x8] sm:$0xff]
    %v73 = vld [vmem:[#allocation2] sm:$0xff]
    %v74 = vmul.f32 %v69, %v71
    %v75 = vmul.f32 %v70, %v72
    %v76 = vadd.f32 %v74, %v75
    %v77 = vadd.f32 %v73, %v76
    %78 = vst [vmem:[#allocation2] sm:$0xff] %v77
    %v79 = vld [vmem:[#allocation3] sm:$0xff]
    %v80 = vadd.f32 %v69, %v71
    %v81 = vadd.f32 %v70, %v72
    %v82 = vadd.f32 %v80, %v81
    %v83 = vadd.f32 %v79, %v82
    %84 = vst [vmem:[#allocation3] sm:$0xff] %v83
    // Predicated region
    $region22: #{tpu_custom_call.1} parent=1 // pred_check
      %p85 = pneg %p63
    $region23: #{tpu_custom_call.1} parent=1 // pred_check_branch
      %87 = sbr.rel (%p85) target = $region25
    $region24: #{tpu_custom_call.1} parent=1 // pred_region
      %v88 = vld [vmem:[#allocation2] sm:$0xff]
      %89 = vadd.xlane.f32.xlu0 %v88
      %v90 = vpop.xlane.xlu0 %89
      %v91 = vrot.slane %v90, 4
      %v92 = vadd.f32 %v90, %v91
      %v93 = vrot.slane %v92, 2
      %v94 = vadd.f32 %v92, %v93
      %v95 = vrot.slane %v94, 1
      %v96 = vadd.f32 %v94, %v95
      %s97 = vtos %v96
      %s98 = scalar_lea.smem [#allocation9], 0
      %99 = sst [smem:[%s98]] %s97
      %v100 = vld [vmem:[#allocation3] sm:$0xff]
      %101 = vadd.xlane.f32.xlu0 %v100
      %v102 = vpop.xlane.xlu0 %101
      %v103 = vrot.slane %v102, 4
      %v104 = vadd.f32 %v102, %v103
      %v105 = vrot.slane %v104, 2
      %v106 = vadd.f32 %v104, %v105
      %v107 = vrot.slane %v106, 1
      %v108 = vadd.f32 %v106, %v107
      %s109 = vtos %v108
      %s110 = scalar_lea.smem [#allocation10], 0
      %111 = sst [smem:[%s110]] %s109
    $region25: #{tpu_custom_call.1} parent=1 // pred_fallthru
      _
    // Predicated region
    $region26: #{tpu_custom_call.1} parent=1 // pred_check
      _
    $region27: #{tpu_custom_call.1} parent=1 // pred_check_branch
      %113 = sbr.rel (0) target = $region29
    $region28: #{tpu_custom_call.1} parent=1 // pred_region
      %s115 = ssub.s32 16, 16
      %116 = vsyncadd [#allocation6], %s115
      %119 = dma.smem_to_hbm [#allocation9], 16, %s2, [#allocation6]
    $region29: #{tpu_custom_call.1} parent=1 // pred_fallthru
      _
    // Predicated region
    $region30: #{tpu_custom_call.1} parent=1 // pred_check
      _
    $region31: #{tpu_custom_call.1} parent=1 // pred_check_branch
      %121 = sbr.rel (0) target = $region33
    $region32: #{tpu_custom_call.1} parent=1 // pred_region
      %s123 = ssub.s32 16, 16
      %124 = vsyncadd [#allocation11], %s123
      %127 = dma.smem_to_hbm [#allocation10], 16, %s3, [#allocation11]
    $region33: #{tpu_custom_call.1} parent=1 // pred_fallthru
      _
    // Predicated region
    $region34: #{tpu_custom_call.1} parent=1 // pred_check
      _
    $region35: #{tpu_custom_call.1} parent=1 // pred_check_branch
      %129 = sbr.rel (0) target = $region37
    $region36: #{tpu_custom_call.1} parent=1 // pred_region
      %130 = dma.done [#allocation6], 16
    $region37: #{tpu_custom_call.1} parent=1 // pred_fallthru
      _
    // Predicated region
    $region38: #{tpu_custom_call.1} parent=1 // pred_check
      _
    $region39: #{tpu_custom_call.1} parent=1 // pred_check_branch
      %132 = sbr.rel (0) target = $region41
    $region40: #{tpu_custom_call.1} parent=1 // pred_region
      %133 = dma.done [#allocation11], 16
    $region41: #{tpu_custom_call.1} parent=1 // pred_fallthru
      _
    %134 = sfence
    %135 = vsyncpa [#allocation5], 1
    %136 = vsyncpa [#allocation8], 1
    %137 = vsyncpa [#allocation6], 1
    %138 = vsyncpa [#allocation11], 1

</llo_original>
